<compile_context>
chip_gen: v5e
topology: v5e:2x2
jax: 0.10.0
libtpu: 0.0.40
codegen_flags: <defaults>
</compile_context>

<pallas_src>
import functools

import jax
import jax.numpy as jnp
from jax import lax
from jax.experimental import pallas as pl
from jax.experimental.pallas import tpu as pltpu

EPS = 1e-5  # nn.BatchNorm1d default eps


# ------------------------------- kernel body -------------------------------

def _im2col_reflect(h2d, N, L, K, pw):
    """h2d: (C, N*L) -> im2col matrix (K*C, N*L) with per-sample reflection padding.

    Row ordering is tap-major / channel-minor, matching the (C_out, K*C_in)
    flattened weight produced in the wrapper.
    """
    per_sample = []
    for n in range(N):                                   # static unroll (tiny N)
        hn = h2d[:, n * L:(n + 1) * L]                   # (C, L)
        # ReflectionPad1d(pw): left = x[pw],...,x[1]; right = x[L-2],...,x[L-1-pw]
        left = [hn[:, pw - j:pw - j + 1] for j in range(pw)]
        right = [hn[:, L - 2 - j:L - 1 - j] for j in range(pw)]
        hp = jnp.concatenate(left + [hn] + right, axis=1) if pw > 0 else hn
        per_sample.append(
            jnp.concatenate([hp[:, k:k + L] for k in range(K)], axis=0))  # (K*C, L)
    return jnp.concatenate(per_sample, axis=1)            # (K*C, N*L)


def _residual_block_kernel(x_ref, w1_ref, b1_ref, w2_ref, b2_ref, g_ref, be_ref,
                           out_ref, *, N, C, L, K, pw):
    x = x_ref[...].astype(jnp.float32)                    # (C, N*L)
    gamma = g_ref[...]                                    # (C, 1)
    beta = be_ref[...]                                    # (C, 1)
    inv_cnt = 1.0 / float(N * L)

    def conv(h2d, w_ref, b_ref):
        # One MXU matmul per conv: (C_out, K*C_in) x (K*C_in, N*L).
        # NOTE: at production sizes on v6e/v7x the dot operands should be cast to
        # bf16 (keep f32 accumulation); kept f32 here for exactness at toy shapes.
        cols = _im2col_reflect(h2d, N, L, K, pw)
        return (jnp.dot(w_ref[...], cols, preferred_element_type=jnp.float32)
                + b_ref[...])                              # (C, N*L)

    def bn_relu(h):
        # Training-mode BatchNorm1d: biased per-channel stats over (N, L) == lanes.
        s = jnp.sum(h, axis=1, keepdims=True)              # (C, 1)
        ss = jnp.sum(h * h, axis=1, keepdims=True)         # (C, 1)
        mean = s * inv_cnt
        var = ss * inv_cnt - mean * mean
        hn = (h - mean) * lax.rsqrt(var + EPS)
        return jnp.maximum(hn * gamma + beta, 0.0)

    h1 = bn_relu(conv(x, w1_ref, b1_ref))
    h2 = bn_relu(conv(h1, w2_ref, b2_ref))
    out_ref[...] = (x + h2).astype(out_ref.dtype)


# --------------------------------- wrapper ---------------------------------

@jax.jit
def residual_block(x, w1, b1, w2, b2, gamma, beta):
    """x: (N, C, L); w*: PyTorch Conv1d layout (C_out, C_in, K); b*, gamma, beta: (C,)."""
    N, C, L = x.shape
    K = w1.shape[-1]
    pw = (K - 1) // 2
    if K % 2 == 0:
        raise ValueError("only odd kernel_size is supported (same-length output)")
    if L < pw + 2:
        raise ValueError("sequence length too small for reflection padding")

    # Layout plumbing (outside the kernel; pure XLA):
    #   activations -> lane-dense (C, N*L); weights -> (C_out, K*C_in), tap-major.
    x2d = jnp.transpose(x, (1, 0, 2)).reshape(C, N * L)
    w1m = jnp.transpose(w1, (0, 2, 1)).reshape(C, K * C)
    w2m = jnp.transpose(w2, (0, 2, 1)).reshape(C, K * C)
    b1c = b1.reshape(C, 1).astype(jnp.float32)
    b2c = b2.reshape(C, 1).astype(jnp.float32)
    g = gamma.reshape(C, 1).astype(jnp.float32)
    be = beta.reshape(C, 1).astype(jnp.float32)

    kernel = functools.partial(_residual_block_kernel, N=N, C=C, L=L, K=K, pw=pw)
    out2d = pl.pallas_call(
        kernel,
        out_shape=jax.ShapeDtypeStruct((C, N * L), x.dtype),
        in_specs=[pl.BlockSpec(memory_space=pltpu.MemorySpace.VMEM)] * 7,
        out_specs=pl.BlockSpec(memory_space=pltpu.MemorySpace.VMEM),
    )(x2d, w1m, b1c, w2m, b2c, g, be)

    return jnp.transpose(out2d.reshape(C, N, L), (1, 0, 2))


# ----------------------------- pure-JAX reference -----------------------------

def ref_forward(x, w1, b1, w2, b2, gamma, beta):
    K = w1.shape[-1]
    pw = (K - 1) // 2

    def reflect_pad(h):
        return jnp.pad(h, ((0, 0), (0, 0), (pw, pw)), mode="reflect")

    def conv(h, w, b):
        hp = reflect_pad(h)
        L = h.shape[-1]
        out = sum(jnp.einsum("oc,ncl->nol", w[:, :, k], hp[:, :, k:k + L])
                  for k in range(K))
        return out + b[None, :, None]

    def bn_relu(h):
        mean = jnp.mean(h, axis=(0, 2), keepdims=True)
        var = jnp.mean((h - mean) ** 2, axis=(0, 2), keepdims=True)
        hn = (h - mean) * lax.rsqrt(var + EPS)
        return jnp.maximum(hn * gamma[None, :, None] + beta[None, :, None], 0.0)

    h = bn_relu(conv(x, w1, b1))
    h = bn_relu(conv(h, w2, b2))
    return x + h


# ----------------------------------- main -----------------------------------

if __name__ == "__main__":
    N, C, L, K = 2, 4, 16, 3   # batch, in_features, sequence length, kernel_size

    key = jax.random.PRNGKey(0)
    kx, kw1, kb1, kw2, kb2 = jax.random.split(key, 5)

    x = jax.random.normal(kx, (N, C, L), dtype=jnp.float32)

    # Conv1d default-style init bound: 1/sqrt(C_in * K); PyTorch weight layout.
    bound = float((C * K) ** -0.5)
    w1 = jax.random.uniform(kw1, (C, C, K), jnp.float32, -bound, bound)
    b1 = jax.random.uniform(kb1, (C,), jnp.float32, -bound, bound)
    w2 = jax.random.uniform(kw2, (C, C, K), jnp.float32, -bound, bound)
    b2 = jax.random.uniform(kb2, (C,), jnp.float32, -bound, bound)

    # Single shared BatchNorm1d instance in the PyTorch module -> one (gamma, beta).
    gamma = jnp.ones((C,), jnp.float32)
    beta = jnp.zeros((C,), jnp.float32)

    out = jax.block_until_ready(residual_block(x, w1, b1, w2, b2, gamma, beta))
    ref = jax.block_until_ready(ref_forward(x, w1, b1, w2, b2, gamma, beta))

    assert out.shape == (N, C, L) and out.dtype == jnp.float32
    assert jnp.allclose(out, ref, atol=1e-4, rtol=1e-4), (
        f"max abs err = {jnp.max(jnp.abs(out - ref))}")

    print("KERNEL_OK")
</pallas_src>

<mosaic_0001>
module attributes {stable_mosaic.version = 11 : i64} {
  func.func @_residual_block_kernel(%arg0: memref<4x32xf32, #tpu.memory_space<vmem>>, %arg1: memref<4x12xf32, #tpu.memory_space<vmem>>, %arg2: memref<4x1xf32, #tpu.memory_space<vmem>>, %arg3: memref<4x12xf32, #tpu.memory_space<vmem>>, %arg4: memref<4x1xf32, #tpu.memory_space<vmem>>, %arg5: memref<4x1xf32, #tpu.memory_space<vmem>>, %arg6: memref<4x1xf32, #tpu.memory_space<vmem>>, %arg7: memref<4x32xf32, #tpu.memory_space<vmem>>) attributes {dimension_semantics = [], scalar_prefetch = 0 : i64, scratch_operands = 0 : i64, tpu.core_type = #tpu.core_type<tc>} {
    %c0 = arith.constant 0 : index
    %c0_0 = arith.constant 0 : index
    %0 = vector.load %arg0[%c0, %c0_0] : memref<4x32xf32, #tpu.memory_space<vmem>>, vector<4x32xf32>
    %c0_1 = arith.constant 0 : index
    %c0_2 = arith.constant 0 : index
    %1 = vector.load %arg5[%c0_1, %c0_2] : memref<4x1xf32, #tpu.memory_space<vmem>>, vector<4x1xf32>
    %c0_3 = arith.constant 0 : index
    %c0_4 = arith.constant 0 : index
    %2 = vector.load %arg6[%c0_3, %c0_4] : memref<4x1xf32, #tpu.memory_space<vmem>>, vector<4x1xf32>
    %3 = vector.extract_strided_slice %0 {offsets = [0, 0], sizes = [4, 16], strides = [1, 1]} : vector<4x32xf32> to vector<4x16xf32>
    %4 = vector.extract_strided_slice %3 {offsets = [0, 1], sizes = [4, 1], strides = [1, 1]} : vector<4x16xf32> to vector<4x1xf32>
    %5 = vector.extract_strided_slice %3 {offsets = [0, 14], sizes = [4, 1], strides = [1, 1]} : vector<4x16xf32> to vector<4x1xf32>
    %6 = tpu.concatenate %4, %3, %5 in 1 : vector<4x1xf32>, vector<4x16xf32>, vector<4x1xf32> -> vector<4x18xf32>
    %7 = vector.extract_strided_slice %6 {offsets = [0, 0], sizes = [4, 16], strides = [1, 1]} : vector<4x18xf32> to vector<4x16xf32>
    %8 = vector.extract_strided_slice %6 {offsets = [0, 1], sizes = [4, 16], strides = [1, 1]} : vector<4x18xf32> to vector<4x16xf32>
    %9 = vector.extract_strided_slice %6 {offsets = [0, 2], sizes = [4, 16], strides = [1, 1]} : vector<4x18xf32> to vector<4x16xf32>
    %10 = tpu.concatenate %7, %8, %9 in 0 : vector<4x16xf32>, vector<4x16xf32>, vector<4x16xf32> -> vector<12x16xf32>
    %11 = vector.extract_strided_slice %0 {offsets = [0, 16], sizes = [4, 16], strides = [1, 1]} : vector<4x32xf32> to vector<4x16xf32>
    %12 = vector.extract_strided_slice %11 {offsets = [0, 1], sizes = [4, 1], strides = [1, 1]} : vector<4x16xf32> to vector<4x1xf32>
    %13 = vector.extract_strided_slice %11 {offsets = [0, 14], sizes = [4, 1], strides = [1, 1]} : vector<4x16xf32> to vector<4x1xf32>
    %14 = tpu.concatenate %12, %11, %13 in 1 : vector<4x1xf32>, vector<4x16xf32>, vector<4x1xf32> -> vector<4x18xf32>
    %15 = vector.extract_strided_slice %14 {offsets = [0, 0], sizes = [4, 16], strides = [1, 1]} : vector<4x18xf32> to vector<4x16xf32>
    %16 = vector.extract_strided_slice %14 {offsets = [0, 1], sizes = [4, 16], strides = [1, 1]} : vector<4x18xf32> to vector<4x16xf32>
    %17 = vector.extract_strided_slice %14 {offsets = [0, 2], sizes = [4, 16], strides = [1, 1]} : vector<4x18xf32> to vector<4x16xf32>
    %18 = tpu.concatenate %15, %16, %17 in 0 : vector<4x16xf32>, vector<4x16xf32>, vector<4x16xf32> -> vector<12x16xf32>
    %19 = tpu.concatenate %10, %18 in 1 : vector<12x16xf32>, vector<12x16xf32> -> vector<12x32xf32>
    %c0_5 = arith.constant 0 : index
    %c0_6 = arith.constant 0 : index
    %20 = vector.load %arg1[%c0_5, %c0_6] : memref<4x12xf32, #tpu.memory_space<vmem>>, vector<4x12xf32>
    %cst = arith.constant dense<0.000000e+00> : vector<4x32xf32>
    %21 = tpu.matmul %20, %19, %cst {dimension_numbers = #tpu.dot_dimension_numbers<[1], [0], [0], [1], [0, 0, 1, 1], [], []>} : vector<4x12xf32>, vector<12x32xf32>, vector<4x32xf32> -> vector<4x32xf32>
    %c0_7 = arith.constant 0 : index
    %c0_8 = arith.constant 0 : index
    %22 = vector.load %arg2[%c0_7, %c0_8] : memref<4x1xf32, #tpu.memory_space<vmem>>, vector<4x1xf32>
    %23 = vector.broadcast %22 : vector<4x1xf32> to vector<4x32xf32>
    %24 = arith.addf %21, %23 : vector<4x32xf32>
    %cst_9 = arith.constant dense<0.000000e+00> : vector<4xf32>
    %25 = vector.multi_reduction <add>, %24, %cst_9 [1] : vector<4x32xf32> to vector<4xf32>
    %26 = vector.shape_cast %25 : vector<4xf32> to vector<4x1xf32>
    %27 = arith.mulf %24, %24 : vector<4x32xf32>
    %cst_10 = arith.constant dense<0.000000e+00> : vector<4xf32>
    %28 = vector.multi_reduction <add>, %27, %cst_10 [1] : vector<4x32xf32> to vector<4xf32>
    %29 = vector.shape_cast %28 : vector<4xf32> to vector<4x1xf32>
    %cst_11 = arith.constant 3.125000e-02 : f32
    %30 = vector.broadcast %cst_11 : f32 to vector<4x1xf32>
    %31 = arith.mulf %26, %30 : vector<4x1xf32>
    %cst_12 = arith.constant 3.125000e-02 : f32
    %32 = vector.broadcast %cst_12 : f32 to vector<4x1xf32>
    %33 = arith.mulf %29, %32 : vector<4x1xf32>
    %34 = arith.mulf %31, %31 : vector<4x1xf32>
    %35 = arith.subf %33, %34 : vector<4x1xf32>
    %36 = vector.broadcast %31 : vector<4x1xf32> to vector<4x32xf32>
    %37 = arith.subf %24, %36 : vector<4x32xf32>
    %cst_13 = arith.constant 9.99999974E-6 : f32
    %38 = vector.broadcast %cst_13 : f32 to vector<4x1xf32>
    %39 = arith.addf %35, %38 : vector<4x1xf32>
    %40 = math.rsqrt %39 : vector<4x1xf32>
    %41 = vector.broadcast %40 : vector<4x1xf32> to vector<4x32xf32>
    %42 = arith.mulf %37, %41 : vector<4x32xf32>
    %43 = vector.broadcast %1 : vector<4x1xf32> to vector<4x32xf32>
    %44 = arith.mulf %42, %43 : vector<4x32xf32>
    %45 = vector.broadcast %2 : vector<4x1xf32> to vector<4x32xf32>
    %46 = arith.addf %44, %45 : vector<4x32xf32>
    %cst_14 = arith.constant 0.000000e+00 : f32
    %47 = vector.broadcast %cst_14 : f32 to vector<4x32xf32>
    %48 = arith.maximumf %46, %47 : vector<4x32xf32>
    %49 = vector.extract_strided_slice %48 {offsets = [0, 0], sizes = [4, 16], strides = [1, 1]} : vector<4x32xf32> to vector<4x16xf32>
    %50 = vector.extract_strided_slice %49 {offsets = [0, 1], sizes = [4, 1], strides = [1, 1]} : vector<4x16xf32> to vector<4x1xf32>
    %51 = vector.extract_strided_slice %49 {offsets = [0, 14], sizes = [4, 1], strides = [1, 1]} : vector<4x16xf32> to vector<4x1xf32>
    %52 = tpu.concatenate %50, %49, %51 in 1 : vector<4x1xf32>, vector<4x16xf32>, vector<4x1xf32> -> vector<4x18xf32>
    %53 = vector.extract_strided_slice %52 {offsets = [0, 0], sizes = [4, 16], strides = [1, 1]} : vector<4x18xf32> to vector<4x16xf32>
    %54 = vector.extract_strided_slice %52 {offsets = [0, 1], sizes = [4, 16], strides = [1, 1]} : vector<4x18xf32> to vector<4x16xf32>
    %55 = vector.extract_strided_slice %52 {offsets = [0, 2], sizes = [4, 16], strides = [1, 1]} : vector<4x18xf32> to vector<4x16xf32>
    %56 = tpu.concatenate %53, %54, %55 in 0 : vector<4x16xf32>, vector<4x16xf32>, vector<4x16xf32> -> vector<12x16xf32>
    %57 = vector.extract_strided_slice %48 {offsets = [0, 16], sizes = [4, 16], strides = [1, 1]} : vector<4x32xf32> to vector<4x16xf32>
    %58 = vector.extract_strided_slice %57 {offsets = [0, 1], sizes = [4, 1], strides = [1, 1]} : vector<4x16xf32> to vector<4x1xf32>
    %59 = vector.extract_strided_slice %57 {offsets = [0, 14], sizes = [4, 1], strides = [1, 1]} : vector<4x16xf32> to vector<4x1xf32>
    %60 = tpu.concatenate %58, %57, %59 in 1 : vector<4x1xf32>, vector<4x16xf32>, vector<4x1xf32> -> vector<4x18xf32>
    %61 = vector.extract_strided_slice %60 {offsets = [0, 0], sizes = [4, 16], strides = [1, 1]} : vector<4x18xf32> to vector<4x16xf32>
    %62 = vector.extract_strided_slice %60 {offsets = [0, 1], sizes = [4, 16], strides = [1, 1]} : vector<4x18xf32> to vector<4x16xf32>
    %63 = vector.extract_strided_slice %60 {offsets = [0, 2], sizes = [4, 16], strides = [1, 1]} : vector<4x18xf32> to vector<4x16xf32>
    %64 = tpu.concatenate %61, %62, %63 in 0 : vector<4x16xf32>, vector<4x16xf32>, vector<4x16xf32> -> vector<12x16xf32>
    %65 = tpu.concatenate %56, %64 in 1 : vector<12x16xf32>, vector<12x16xf32> -> vector<12x32xf32>
    %c0_15 = arith.constant 0 : index
    %c0_16 = arith.constant 0 : index
    %66 = vector.load %arg3[%c0_15, %c0_16] : memref<4x12xf32, #tpu.memory_space<vmem>>, vector<4x12xf32>
    %cst_17 = arith.constant dense<0.000000e+00> : vector<4x32xf32>
    %67 = tpu.matmul %66, %65, %cst_17 {dimension_numbers = #tpu.dot_dimension_numbers<[1], [0], [0], [1], [0, 0, 1, 1], [], []>} : vector<4x12xf32>, vector<12x32xf32>, vector<4x32xf32> -> vector<4x32xf32>
    %c0_18 = arith.constant 0 : index
    %c0_19 = arith.constant 0 : index
    %68 = vector.load %arg4[%c0_18, %c0_19] : memref<4x1xf32, #tpu.memory_space<vmem>>, vector<4x1xf32>
    %69 = vector.broadcast %68 : vector<4x1xf32> to vector<4x32xf32>
    %70 = arith.addf %67, %69 : vector<4x32xf32>
    %cst_20 = arith.constant dense<0.000000e+00> : vector<4xf32>
    %71 = vector.multi_reduction <add>, %70, %cst_20 [1] : vector<4x32xf32> to vector<4xf32>
    %72 = vector.shape_cast %71 : vector<4xf32> to vector<4x1xf32>
    %73 = arith.mulf %70, %70 : vector<4x32xf32>
    %cst_21 = arith.constant dense<0.000000e+00> : vector<4xf32>
    %74 = vector.multi_reduction <add>, %73, %cst_21 [1] : vector<4x32xf32> to vector<4xf32>
    %75 = vector.shape_cast %74 : vector<4xf32> to vector<4x1xf32>
    %cst_22 = arith.constant 3.125000e-02 : f32
    %76 = vector.broadcast %cst_22 : f32 to vector<4x1xf32>
    %77 = arith.mulf %72, %76 : vector<4x1xf32>
    %cst_23 = arith.constant 3.125000e-02 : f32
    %78 = vector.broadcast %cst_23 : f32 to vector<4x1xf32>
    %79 = arith.mulf %75, %78 : vector<4x1xf32>
    %80 = arith.mulf %77, %77 : vector<4x1xf32>
    %81 = arith.subf %79, %80 : vector<4x1xf32>
    %82 = vector.broadcast %77 : vector<4x1xf32> to vector<4x32xf32>
    %83 = arith.subf %70, %82 : vector<4x32xf32>
    %cst_24 = arith.constant 9.99999974E-6 : f32
    %84 = vector.broadcast %cst_24 : f32 to vector<4x1xf32>
    %85 = arith.addf %81, %84 : vector<4x1xf32>
    %86 = math.rsqrt %85 : vector<4x1xf32>
    %87 = vector.broadcast %86 : vector<4x1xf32> to vector<4x32xf32>
    %88 = arith.mulf %83, %87 : vector<4x32xf32>
    %89 = vector.broadcast %1 : vector<4x1xf32> to vector<4x32xf32>
    %90 = arith.mulf %88, %89 : vector<4x32xf32>
    %91 = vector.broadcast %2 : vector<4x1xf32> to vector<4x32xf32>
    %92 = arith.addf %90, %91 : vector<4x32xf32>
    %cst_25 = arith.constant 0.000000e+00 : f32
    %93 = vector.broadcast %cst_25 : f32 to vector<4x32xf32>
    %94 = arith.maximumf %92, %93 : vector<4x32xf32>
    %95 = arith.addf %0, %94 : vector<4x32xf32>
    %c0_26 = arith.constant 0 : index
    %c0_27 = arith.constant 0 : index
    %96 = vector.load %arg7[%c0_26, %c0_27] : memref<4x32xf32, #tpu.memory_space<vmem>>, vector<4x32xf32>
    tpu.vector_store %arg7[%c0_26, %c0_27], %95 {strides = array<i32>} : memref<4x32xf32, #tpu.memory_space<vmem>>, vector<4x32xf32>,
    return
  }
}

</mosaic_0001>

<llo_original>
// kernel: residual_block.1
$region0: #{residual_block.1}
  #allocation0 [shape = 'u32[]', space=smem, size = 0x4, offset = 0x4, fixed_abs, tag = 'smem constant byte address 0x4 - core index']
  #allocation1 [shape = 'u32[72,128]{1,0:T(1,128)}', space=vmem, size = 0x9000, scoped, tag = 'internal scratch']
  %s0 = inlined_call_operand.vmem [shape: f32[4,32], index: 0, kind: input, shape index: {}]
  %s1 = inlined_call_operand.vmem [shape: f32[4,12], index: 1, kind: input, shape index: {}]
  %s2 = inlined_call_operand.vmem [shape: f32[4,1], index: 2, kind: input, shape index: {}]
  %s3 = inlined_call_operand.vmem [shape: f32[4,12], index: 3, kind: input, shape index: {}]
  %s4 = inlined_call_operand.vmem [shape: f32[4,1], index: 4, kind: input, shape index: {}]
  %s5 = inlined_call_operand.vmem [shape: f32[4,1], index: 5, kind: input, shape index: {}]
  %s6 = inlined_call_operand.vmem [shape: f32[4,1], index: 6, kind: input, shape index: {}]
  %s7 = inlined_call_operand.vmem [shape: f32[4,32], index: 7, kind: output, shape index: {}]
  %s8 = sld [smem:[#allocation0]]
  $region38: #{residual_block.1} parent=0
    _
  %s10 = ssub.s32 1, %s8
  %s11 = scalar_select 0, %s10, %s8
  // Predicated region
  $region2: #{residual_block.1} parent=0 // pred_check
    _
  $region3: #{residual_block.1} parent=0 // pred_check_branch
    %13 = sbr.rel (0) target = $region5
  $region4: #{residual_block.1} parent=0 // pred_region
    _
  $region5: #{residual_block.1} parent=0 // pred_fallthru
    _
  // Predicated region
  $region6: #{residual_block.1} parent=0 // pred_check
    _
  $region7: #{residual_block.1} parent=0 // pred_check_branch
    %15 = sbr.rel (0) target = $region9
  $region8: #{residual_block.1} parent=0 // pred_region
    _
  $region9: #{residual_block.1} parent=0 // pred_fallthru
    _
  // Predicated region
  $region10: #{residual_block.1} parent=0 // pred_check
    _
  $region11: #{residual_block.1} parent=0 // pred_check_branch
    %17 = sbr.rel (0) target = $region13
  $region12: #{residual_block.1} parent=0 // pred_region
    _
  $region13: #{residual_block.1} parent=0 // pred_fallthru
    _
  // Predicated region
  $region14: #{residual_block.1} parent=0 // pred_check
    _
  $region15: #{residual_block.1} parent=0 // pred_check_branch
    %19 = sbr.rel (0) target = $region17
  $region16: #{residual_block.1} parent=0 // pred_region
    _
  $region17: #{residual_block.1} parent=0 // pred_fallthru
    _
  // Predicated region
  $region18: #{residual_block.1} parent=0 // pred_check
    _
  $region19: #{residual_block.1} parent=0 // pred_check_branch
    %21 = sbr.rel (0) target = $region21
  $region20: #{residual_block.1} parent=0 // pred_region
    _
  $region21: #{residual_block.1} parent=0 // pred_fallthru
    _
  // Predicated region
  $region22: #{residual_block.1} parent=0 // pred_check
    _
  $region23: #{residual_block.1} parent=0 // pred_check_branch
    %23 = sbr.rel (0) target = $region25
  $region24: #{residual_block.1} parent=0 // pred_region
    _
  $region25: #{residual_block.1} parent=0 // pred_fallthru
    _
  // Predicated region
  $region26: #{residual_block.1} parent=0 // pred_check
    _
  $region27: #{residual_block.1} parent=0 // pred_check_branch
    %25 = sbr.rel (0) target = $region29
  $region28: #{residual_block.1} parent=0 // pred_region
    _
  $region29: #{residual_block.1} parent=0 // pred_fallthru
    _
  %v26 = vld [vmem:[%s0] sm:$0xf]
  %v27 = vld [vmem:[%s5] sm:$0xf]
  %v28 = vld [vmem:[%s6] sm:$0xf]
  %30 = vrot.lane.b32.xlu0 %v26, 127
  %v31 = vpop.permute.xlu0 %30
  %33 = vrot.lane.b32.xlu0 %v26, 1
  %v34 = vpop.permute.xlu0 %33
  %36 = vrot.lane.b32.xlu0 %v26, 3
  %v37 = vpop.permute.xlu0 %36
  %vm39 = vcmask 7168
  %v40 = vsel %vm39, %v31, %v34
  %vm41 = vcmask 138240
  %v42 = vsel %vm41, %v40, %v37
  %v44 = vrot.slane %v42, 4
  %45 = vrot.lane.b32.xlu0 %v44, 127
  %v46 = vpop.permute.xlu0 %45
  %48 = vrot.lane.b32.xlu0 %v42, 126
  %v49 = vpop.permute.xlu0 %48
  %vm51 = vcmask 1043456
  %v52 = vsel %vm51, %v42, %v46
  %53 = vrot.lane.b32.xlu0 %v26, 111
  %v54 = vpop.permute.xlu0 %53
  %56 = vrot.lane.b32.xlu0 %v26, 113
  %v57 = vpop.permute.xlu0 %56
  %59 = vrot.lane.b32.xlu0 %v26, 115
  %v60 = vpop.permute.xlu0 %59
  %v62 = vsel %vm39, %v54, %v57
  %v63 = vsel %vm41, %v62, %v60
  %v65 = vrot.slane %v63, 4
  %66 = vrot.lane.b32.xlu0 %v65, 127
  %v67 = vpop.permute.xlu0 %66
  %69 = vrot.lane.b32.xlu0 %v63, 126
  %v70 = vpop.permute.xlu0 %69
  %v71 = vsel %vm51, %v63, %v67
  %73 = vrot.lane.b32.xlu0 %v71, 16
  %v74 = vpop.permute.xlu0 %73
  %75 = vrot.lane.b32.xlu0 %v70, 16
  %v76 = vpop.permute.xlu0 %75
  %vm79 = vcmask 130048
  %v80 = vsel %vm79, %v52, %v74
  %v81 = vsel %vm79, %v49, %v76
  %v82 = vld [vmem:[%s1] sm:$0xf]
  %v83 = vld [vmem:[%s2] sm:$0xf]
  %85 = vset.pattern.permute.xlu0 0
  %86 = vperm.xlu0 %85, %v83
  %v87 = vpop.permute.xlu0 %86
  %vm89 = vcmask 97280
  %v91 = vsel %vm89, %v82, 0
  %v94 = vsel %vm51, %v81, 0
  %96 = vmatpush.msra.mxu0 0.0
  %97 = vmatpush.msra.mxu0 0.0
  %98 = vmatpush.msra.mxu0 0.0
  %99 = vmatpush.msra.mxu0 0.0
  %100 = vmatpush.msra.mxu0 0.0
  %101 = vmatpush.msra.mxu0 0.0
  %102 = vmatpush.msra.mxu0 0.0
  %103 = vmatpush.msra.mxu0 0.0
  %104 = vmatpush.msra.mxu0 0.0
  %105 = vmatpush.msra.mxu0 0.0
  %106 = vmatpush.msra.mxu0 0.0
  %107 = vmatpush.msra.mxu0 0.0
  %108 = vmatpush.msra.mxu0 0.0
  %109 = vmatpush.msra.mxu0 0.0
  %110 = vmatpush.msra.mxu0 %v94
  %111 = vmatpush.msra.mxu0 %v80
  %112 = vmatmul.f32.gmra.mxu0 %v91
  %v113 = vpop.f32.mrf.mxu0
  %v114 = vadd.f32 %v87, %v113
  %115 = vdwg.mxu0
  %vm116 = vcmask 257024
  %v117 = vsel %vm116, %v114, 0.0
  %118 = vadd.xlane.f32.xlu0 %v117
  %v119 = vpop.xlane.xlu0 %118
  %v120 = vmul.f32 %v114, %v114
  %v121 = vsel %vm116, %v120, 0.0
  %122 = vadd.xlane.f32.xlu0 %v121
  %v123 = vpop.xlane.xlu0 %122
  %v124 = vmul.f32 %v119, 0.03125
  %v125 = vmul.f32 %v123, 0.03125
  %v126 = vmul.f32 %v124, %v124
  %v127 = vsub.f32 %v125, %v126
  %v128 = vsub.f32 %v114, %v124
  %v129 = vadd.f32 %v127, 1e-05
  %v130 = vrsqrt.pop %v129
  %v131 = vmul.f32 %v130, %v129
  %v132 = vmul.f32 %v131, %v130
  %v133 = vmul.f32 0.5, %v132
  %v134 = vsub.f32 1.5, %v133
  %v135 = vmul.f32 %v130, %v134
  %vm136 = vweird.f32 %v129
  %vm137 = vweird.f32 %v130
  %vm138 = vmor %vm136, %vm137
  %v139 = vsel %vm138, %v130, %v135
  %v140 = vmul.f32 %v128, %v139
  %142 = vset.pattern.permute.xlu0 0
  %143 = vperm.xlu0 %142, %v27
  %v144 = vpop.permute.xlu0 %143
  %v146 = vmul.f32 %v140, %v144
  %148 = vset.pattern.permute.xlu0 0
  %149 = vperm.xlu0 %148, %v28
  %v150 = vpop.permute.xlu0 %149
  %v152 = vadd.f32 %v146, %v150
  %v153 = vmax.f32 %v152, 0.0
  %155 = vrot.lane.b32.xlu0 %v153, 127
  %v156 = vpop.permute.xlu0 %155
  %158 = vrot.lane.b32.xlu0 %v153, 1
  %v159 = vpop.permute.xlu0 %158
  %161 = vrot.lane.b32.xlu0 %v153, 3
  %v162 = vpop.permute.xlu0 %161
  %v164 = vsel %vm39, %v156, %v159
  %v165 = vsel %vm41, %v164, %v162
  %v167 = vrot.slane %v165, 4
  %168 = vrot.lane.b32.xlu0 %v167, 127
  %v169 = vpop.permute.xlu0 %168
  %171 = vrot.lane.b32.xlu0 %v165, 126
  %v172 = vpop.permute.xlu0 %171
  %v174 = vsel %vm51, %v165, %v169
  %175 = vrot.lane.b32.xlu0 %v153, 111
  %v176 = vpop.permute.xlu0 %175
  %178 = vrot.lane.b32.xlu0 %v153, 113
  %v179 = vpop.permute.xlu0 %178
  %181 = vrot.lane.b32.xlu0 %v153, 115
  %v182 = vpop.permute.xlu0 %181
  %v184 = vsel %vm39, %v176, %v179
  %v185 = vsel %vm41, %v184, %v182
  %v187 = vrot.slane %v185, 4
  %188 = vrot.lane.b32.xlu0 %v187, 127
  %v189 = vpop.permute.xlu0 %188
  %191 = vrot.lane.b32.xlu0 %v185, 126
  %v192 = vpop.permute.xlu0 %191
  %v193 = vsel %vm51, %v185, %v189
  %195 = vrot.lane.b32.xlu0 %v193, 16
  %v196 = vpop.permute.xlu0 %195
  %197 = vrot.lane.b32.xlu0 %v192, 16
  %v198 = vpop.permute.xlu0 %197
  %v201 = vsel %vm79, %v174, %v196
  %v202 = vsel %vm79, %v172, %v198
  %v203 = vld [vmem:[%s3] sm:$0xf]
  %v204 = vld [vmem:[%s4] sm:$0xf]
  %206 = vset.pattern.permute.xlu0 0
  %207 = vperm.xlu0 %206, %v204
  %v208 = vpop.permute.xlu0 %207
  %v211 = vsel %vm89, %v203, 0
  %v214 = vsel %vm51, %v202, 0
  %216 = vmatpush.msra.mxu0 0.0
  %217 = vmatpush.msra.mxu0 0.0
  %218 = vmatpush.msra.mxu0 0.0
  %219 = vmatpush.msra.mxu0 0.0
  %220 = vmatpush.msra.mxu0 0.0
  %221 = vmatpush.msra.mxu0 0.0
  %222 = vmatpush.msra.mxu0 0.0
  %223 = vmatpush.msra.mxu0 0.0
  %224 = vmatpush.msra.mxu0 0.0
  %225 = vmatpush.msra.mxu0 0.0
  %226 = vmatpush.msra.mxu0 0.0
  %227 = vmatpush.msra.mxu0 0.0
  %228 = vmatpush.msra.mxu0 0.0
  %229 = vmatpush.msra.mxu0 0.0
  %230 = vmatpush.msra.mxu0 %v214
  %231 = vmatpush.msra.mxu0 %v201
  %232 = vmatmul.f32.gmra.mxu0 %v211
  %v233 = vpop.f32.mrf.mxu0
  %v234 = vadd.f32 %v208, %v233
  %235 = vdwg.mxu0
  %v236 = vsel %vm116, %v234, 0.0
  %237 = vadd.xlane.f32.xlu0 %v236
  %v238 = vpop.xlane.xlu0 %237
  %v239 = vmul.f32 %v234, %v234
  %v240 = vsel %vm116, %v239, 0.0
  %241 = vadd.xlane.f32.xlu0 %v240
  %v242 = vpop.xlane.xlu0 %241
  %v243 = vmul.f32 %v238, 0.03125
  %v244 = vmul.f32 %v242, 0.03125
  %v245 = vmul.f32 %v243, %v243
  %v246 = vsub.f32 %v244, %v245
  %v247 = vsub.f32 %v234, %v243
  %v248 = vadd.f32 %v246, 1e-05
  %v249 = vrsqrt.pop %v248
  %v250 = vmul.f32 %v249, %v248
  %v251 = vmul.f32 %v250, %v249
  %v252 = vmul.f32 0.5, %v251
  %v253 = vsub.f32 1.5, %v252
  %v254 = vmul.f32 %v249, %v253
  %vm255 = vweird.f32 %v248
  %vm256 = vweird.f32 %v249
  %vm257 = vmor %vm255, %vm256
  %v258 = vsel %vm257, %v249, %v254
  %v259 = vmul.f32 %v247, %v258
  %v260 = vmul.f32 %v259, %v144
  %v261 = vadd.f32 %v260, %v150
  %v262 = vmax.f32 %v261, 0.0
  %v263 = vadd.f32 %v26, %v262
  %264 = vst.msk [vmem:[%s7] sm:$0xf] %vm116, %v263
  // Predicated region
  $region30: #{residual_block.1} parent=0 // pred_check
    _
  $region31: #{residual_block.1} parent=0 // pred_check_branch
    %266 = sbr.rel (0) target = $region33
  $region32: #{residual_block.1} parent=0 // pred_region
    _
  $region33: #{residual_block.1} parent=0 // pred_fallthru
    _
  // Predicated region
  $region34: #{residual_block.1} parent=0 // pred_check
    _
  $region35: #{residual_block.1} parent=0 // pred_check_branch
    %268 = sbr.rel (0) target = $region37
  $region36: #{residual_block.1} parent=0 // pred_region
    _
  $region37: #{residual_block.1} parent=0 // pred_fallthru
    _

</llo_original>
